<compile_context>
chip_gen: v7x
topology: tpu7x:2x2x1
jax: 0.10.0
libtpu: 0.0.40
codegen_flags: <defaults>
</compile_context>

<pallas_src>
import functools

import jax
import jax.numpy as jnp
from jax.experimental import pallas as pl
from jax.experimental.pallas import tpu as pltpu

SPEECH_EMBED_DIM = 512
HIDDEN_DIMS = [300, 150, 50]


def _round_up(x, m):
    return (x + m - 1) // m * m


def _pad2d(x, rows, cols):
    return jnp.pad(x, ((0, rows - x.shape[0]), (0, cols - x.shape[1])))


def _joint_embed_kernel(v_ref, w01_ref, b01_ref, w2_ref, b2_ref, o_ref):
    # Cast the f32 voice tile to the MXU dtype in-kernel (VPU slack is free;
    # avoids a separate XLA cast pass over HBM before the kernel).
    x = v_ref[...].astype(w01_ref.dtype)
    # Fused speech_projection + model[0]: Linear(512 -> 150[->256]).
    h = jnp.dot(x, w01_ref[...],
                preferred_element_type=jnp.float32) + b01_ref[...]
    # model[1]: ReLU (f32 on the VPU; safe on v5e which has no bf16 VPU path).
    h = jnp.maximum(h, 0.0)
    # model[2]: Linear(150[->256] -> 50[->128]).
    out = jnp.dot(h.astype(w2_ref.dtype), w2_ref[...],
                  preferred_element_type=jnp.float32) + b2_ref[...]
    o_ref[...] = out.astype(o_ref.dtype)


@functools.partial(jax.jit, static_argnames=("batch_tile", "compute_dtype"))
def joint_embedding_net(voice, params, *, batch_tile=1024,
                        compute_dtype=jnp.bfloat16):
    """voice: [B, 512] float32. params: dict of [in, out] weights, [1, out] biases."""
    B, D = voice.shape
    assert D == SPEECH_EMBED_DIM

    d_out = HIDDEN_DIMS[-1]                      # 50
    p1 = _round_up(HIDDEN_DIMS[1], 128)          # 150 -> 256
    p2 = _round_up(HIDDEN_DIMS[2], 128)          # 50  -> 128

    # ---- algebraic fusion of the first two linears (no activation between them)
    w01 = params["w0"] @ params["w1"]                    # [512, 150]  (tiny XLA matmul)
    b01 = params["b0"] @ params["w1"] + params["b1"]     # [1, 150]

    # ---- lane-dense zero-padded params (zero rows/cols contribute exactly 0)
    w01 = _pad2d(w01, D, p1).astype(compute_dtype)
    w2 = _pad2d(params["w2"], p1, p2).astype(compute_dtype)
    b01 = _pad2d(b01, 1, p1).astype(jnp.float32)
    b2 = _pad2d(params["b2"], 1, p2).astype(jnp.float32)

    # ---- batch tiling:
    #   * pad B only up to a multiple of 8 (sublane alignment, <= 7 extra rows)
    #   * pick a tile that (a) never exceeds batch_tile, (b) gives >= 2 grid
    #     steps whenever B > 8 so both v7x TensorCores get work, (c) never
    #     exceeds the (padded) array. Partial last blocks are handled by Pallas;
    #     the garbage rows are independent and sliced away below.
    b8 = _round_up(B, 8)
    half = _round_up(pl.cdiv(b8, 2), 8)
    tile = max(8, min(batch_tile, half))
    grid = (pl.cdiv(b8, tile),)

    x = voice
    if b8 != B:
        x = jnp.pad(x, ((0, b8 - B), (0, 0)))

    # Constant index_map => block fetched once, stays VMEM-resident across steps.
    const = lambda shape: pl.BlockSpec(shape, lambda i: (0, 0))

    out = pl.pallas_call(
        _joint_embed_kernel,
        out_shape=jax.ShapeDtypeStruct((b8, p2), jnp.float32),
        grid_spec=pltpu.PrefetchScalarGridSpec(
            num_scalar_prefetch=0,
            grid=grid,
            in_specs=[
                pl.BlockSpec((tile, D), lambda i: (i, 0)),   # voice tile (f32)
                const((D, p1)), const((1, p1)),              # fused W01, b01
                const((p1, p2)), const((1, p2)),             # W2, b2
            ],
            out_specs=pl.BlockSpec((tile, p2), lambda i: (i, 0)),
        ),
        compiler_params=pltpu.CompilerParams(
            dimension_semantics=("parallel",),
            vmem_limit_bytes=32 * 1024 * 1024,
        ),
    )(x, w01, b01, w2, b2)

    return out[:B, :d_out]


def init_params(key):
    """Deterministic init matching PyTorch nn.Linear default U(-1/sqrt(fan_in), +)."""
    dims = [SPEECH_EMBED_DIM] + HIDDEN_DIMS  # [512, 300, 150, 50]
    params = {}
    for idx, (fan_in, fan_out) in enumerate(zip(dims[:-1], dims[1:])):
        key, kw, kb = jax.random.split(key, 3)
        bound = 1.0 / jnp.sqrt(fan_in)
        # stored as [in, out] (i.e. W^T relative to PyTorch's [out, in])
        params[f"w{idx}"] = jax.random.uniform(
            kw, (fan_in, fan_out), jnp.float32, -bound, bound)
        params[f"b{idx}"] = jax.random.uniform(
            kb, (1, fan_out), jnp.float32, -bound, bound)
    return params


def reference(voice, params):
    """Pure-f32 JAX reference of the (un-fused) PyTorch forward pass."""
    h0 = voice @ params["w0"] + params["b0"]
    h1 = jnp.maximum(h0 @ params["w1"] + params["b1"], 0.0)
    return h1 @ params["w2"] + params["b2"]


if __name__ == "__main__":
    key = jax.random.PRNGKey(0)
    kp, kv = jax.random.split(key)
    params = init_params(kp)

    batch = 12  # small, intentionally not a multiple of 8 to exercise padding
    voice = jax.random.normal(kv, (batch, SPEECH_EMBED_DIM), jnp.float32)

    ref = reference(voice, params)

    # f32 MXU path (rounding order differs slightly from the un-fused reference
    # due to the W0@W1 fusion and MXU f32 emulation; tolerance covers it).
    out_f32 = jax.block_until_ready(
        joint_embedding_net(voice, params, compute_dtype=jnp.float32))
    assert out_f32.shape == (batch, HIDDEN_DIMS[-1]), out_f32.shape
    assert jnp.allclose(out_f32, ref, atol=3e-4, rtol=3e-4), "f32 mismatch vs reference"

    # Default bf16-MXU path (recommended on v6e/v7x); f32 accumulate + f32 epilogue.
    out_bf16 = jax.block_until_ready(joint_embedding_net(voice, params))
    assert out_bf16.shape == (batch, HIDDEN_DIMS[-1]), out_bf16.shape
    assert jnp.allclose(out_bf16, ref, atol=2e-2, rtol=2e-2), "bf16 mismatch vs reference"

    print("KERNEL_OK")
</pallas_src>

<mosaic_0001>
module attributes {stable_mosaic.version = 11 : i64} {
  func.func @_joint_embed_kernel(%arg0: i32, %arg1: memref<8x512xf32, #tpu.memory_space<vmem>>, %arg2: memref<512x256xf32, #tpu.memory_space<vmem>>, %arg3: memref<1x256xf32, #tpu.memory_space<vmem>>, %arg4: memref<256x128xf32, #tpu.memory_space<vmem>>, %arg5: memref<1x128xf32, #tpu.memory_space<vmem>>, %arg6: memref<8x128xf32, #tpu.memory_space<vmem>>) attributes {dimension_semantics = [#tpu.dimension_semantics<parallel>], iteration_bounds = array<i64: 2>, scalar_prefetch = 0 : i64, scratch_operands = 0 : i64, tpu.core_type = #tpu.core_type<tc>, window_params = [{transform_indices = @transform_0, window_bounds = array<i64: 8, 512>}, {pipeline_mode = #tpu.pipeline_mode<synchronous>, transform_indices = @transform_1, window_bounds = array<i64: 512, 256>}, {pipeline_mode = #tpu.pipeline_mode<synchronous>, transform_indices = @transform_2, window_bounds = array<i64: 1, 256>}, {pipeline_mode = #tpu.pipeline_mode<synchronous>, transform_indices = @transform_3, window_bounds = array<i64: 256, 128>}, {pipeline_mode = #tpu.pipeline_mode<synchronous>, transform_indices = @transform_4, window_bounds = array<i64: 1, 128>}, {transform_indices = @transform_5, window_bounds = array<i64: 8, 128>}]} {
    %c0 = arith.constant 0 : index
    %c0_0 = arith.constant 0 : index
    %0 = vector.load %arg1[%c0, %c0_0] : memref<8x512xf32, #tpu.memory_space<vmem>>, vector<8x512xf32>
    %c0_1 = arith.constant 0 : index
    %c0_2 = arith.constant 0 : index
    %1 = vector.load %arg2[%c0_1, %c0_2] : memref<512x256xf32, #tpu.memory_space<vmem>>, vector<512x256xf32>
    %cst = arith.constant dense<0.000000e+00> : vector<8x256xf32>
    %2 = tpu.matmul %0, %1, %cst {dimension_numbers = #tpu.dot_dimension_numbers<[1], [0], [0], [1], [0, 0, 1, 1], [], []>} : vector<8x512xf32>, vector<512x256xf32>, vector<8x256xf32> -> vector<8x256xf32>
    %c0_3 = arith.constant 0 : index
    %c0_4 = arith.constant 0 : index
    %3 = vector.load %arg3[%c0_3, %c0_4] : memref<1x256xf32, #tpu.memory_space<vmem>>, vector<1x256xf32>
    %4 = vector.broadcast %3 : vector<1x256xf32> to vector<8x256xf32>
    %5 = arith.addf %2, %4 : vector<8x256xf32>
    %cst_5 = arith.constant 0.000000e+00 : f32
    %6 = vector.broadcast %cst_5 : f32 to vector<8x256xf32>
    %7 = arith.maximumf %5, %6 : vector<8x256xf32>
    %c0_6 = arith.constant 0 : index
    %c0_7 = arith.constant 0 : index
    %8 = vector.load %arg4[%c0_6, %c0_7] : memref<256x128xf32, #tpu.memory_space<vmem>>, vector<256x128xf32>
    %cst_8 = arith.constant dense<0.000000e+00> : vector<8x128xf32>
    %9 = tpu.matmul %7, %8, %cst_8 {dimension_numbers = #tpu.dot_dimension_numbers<[1], [0], [0], [1], [0, 0, 1, 1], [], []>} : vector<8x256xf32>, vector<256x128xf32>, vector<8x128xf32> -> vector<8x128xf32>
    %c0_9 = arith.constant 0 : index
    %c0_10 = arith.constant 0 : index
    %10 = vector.load %arg5[%c0_9, %c0_10] : memref<1x128xf32, #tpu.memory_space<vmem>>, vector<1x128xf32>
    %11 = vector.broadcast %10 : vector<1x128xf32> to vector<8x128xf32>
    %12 = arith.addf %9, %11 : vector<8x128xf32>
    %c0_11 = arith.constant 0 : index
    %c0_12 = arith.constant 0 : index
    %13 = vector.load %arg6[%c0_11, %c0_12] : memref<8x128xf32, #tpu.memory_space<vmem>>, vector<8x128xf32>
    tpu.vector_store %arg6[%c0_11, %c0_12], %12 {strides = array<i32>} : memref<8x128xf32, #tpu.memory_space<vmem>>, vector<8x128xf32>,
    return
  }
  func.func @transform_0(%arg0: i32) -> (i32, i32) {
    %c0_i32 = arith.constant 0 : i32
    %c0_i32_0 = arith.constant 0 : i32
    return %arg0, %c0_i32 : i32, i32
  }
  func.func @transform_1(%arg0: i32) -> (i32, i32) {
    %c0_i32 = arith.constant 0 : i32
    %c0_i32_0 = arith.constant 0 : i32
    %c0_i32_1 = arith.constant 0 : i32
    return %c0_i32, %c0_i32_0 : i32, i32
  }
  func.func @transform_2(%arg0: i32) -> (i32, i32) {
    %c0_i32 = arith.constant 0 : i32
    %c0_i32_0 = arith.constant 0 : i32
    %c0_i32_1 = arith.constant 0 : i32
    return %c0_i32, %c0_i32_0 : i32, i32
  }
  func.func @transform_3(%arg0: i32) -> (i32, i32) {
    %c0_i32 = arith.constant 0 : i32
    %c0_i32_0 = arith.constant 0 : i32
    %c0_i32_1 = arith.constant 0 : i32
    return %c0_i32, %c0_i32_0 : i32, i32
  }
  func.func @transform_4(%arg0: i32) -> (i32, i32) {
    %c0_i32 = arith.constant 0 : i32
    %c0_i32_0 = arith.constant 0 : i32
    %c0_i32_1 = arith.constant 0 : i32
    return %c0_i32, %c0_i32_0 : i32, i32
  }
  func.func @transform_5(%arg0: i32) -> (i32, i32) {
    %c0_i32 = arith.constant 0 : i32
    %c0_i32_0 = arith.constant 0 : i32
    return %arg0, %c0_i32 : i32, i32
  }
}

</mosaic_0001>

<llo_original>
// kernel: joint_embedding_net.1
$region0: #{joint_embedding_net.1}
  #allocation0 [shape = 'u32[]', space=smem, size = 0x4, offset = 0x4, fixed_abs, tag = 'smem constant byte address 0x4 - core index']
  #allocation1 [shape = 'u32[144,128]{1,0:T(1,128)}', space=vmem, size = 0x12000, scoped, tag = 'internal scratch']
  %s0 = inlined_call_operand.vmem [shape: f32[16,512], index: 0, kind: input, shape index: {}]
  %s1 = inlined_call_operand.vmem [shape: f32[512,256], index: 1, kind: input, shape index: {}]
  %s2 = inlined_call_operand.vmem [shape: f32[1,256], index: 2, kind: input, shape index: {}]
  %s3 = inlined_call_operand.vmem [shape: f32[256,128], index: 3, kind: input, shape index: {}]
  %s4 = inlined_call_operand.vmem [shape: f32[1,128], index: 4, kind: input, shape index: {}]
  %s5 = inlined_call_operand.hbm [shape: f32[16,128], index: 5, kind: output, shape index: {}]
  %s6 = sld [smem:[#allocation0]]
  $region53: #{joint_embedding_net.1} parent=0
    _
  %s8 = ssub.s32 1, %s6
  %s9 = scalar_select 0, %s8, %s6
  $region1: #{joint_embedding_net.1} parent=0
    #allocation2 [shape = 'u8[8192]{0}', space=vmem, size = 0x2000, scoped, tag = 'output window, operand 0']
    #allocation3 [shape = 's32[2]{0}', space=sflag, size = 0x8, scoped, tag = 'scoped memory for joint_embedding_net.1']
    %10 = vsyncpa [#allocation3], 0
    %s11 = scalar_lea.sflag [#allocation3], 1
    %12 = vsyncpa %s11, 0
    loop: start=0, step=1, limit=4
    $region2: #{joint_embedding_net.1} parent=1 // loop_pre_header
      _
    $region3: #{joint_embedding_net.1} parent=1 // loop_header
      %s14 = sphi 0, %s18
      %p15 = scmp.ge.s32.totalorder %s14, 4
      %s24 = sphi 0, %s26
      %s27 = sphi 0, %s24
      %s28 = sphi 0, %s27
      %s44 = sphi 0, %s28
      %s48 = sphi 0, %s48
      %s50 = sphi 0, %s48
      %s51 = sphi 0, %s50
      %s65 = sphi 0, %s51
      %s69 = sphi 0, %s69
      %s71 = sphi 0, %s69
      %s72 = sphi 0, %s71
      %s86 = sphi 0, %s72
      %s90 = sphi 0, %s90
      %s92 = sphi 0, %s90
      %s93 = sphi 0, %s92
      %s107 = sphi 0, %s93
      %s111 = sphi 0, %s111
      %s113 = sphi 0, %s111
      %s114 = sphi 0, %s113
      %s128 = sphi 0, %s114
      %s134 = sphi 0, %s136
      %s137 = sphi 0, %s134
      %s138 = sphi 0, %s137
      %s154 = sphi 0, %s138
    $region4: #{joint_embedding_net.1} parent=1 // loop_header_branch
      %17 = sbr.rel (%p15) target = $region8
    $region5: #{joint_embedding_net.1} parent=1 // loop_body
      %s19 = ssub.s32 %s14, 1
      %s20 = ssub.s32 %s14, 2
      %s21 = sadd.s32 %s14, 1
      %s22 = ssub.s32 %s14, %s21
      %p23 = scmp.eq.s32.totalorder %s22, 0
      %s25 = sadd.s32 %s24, 1
      %s26 = scalar_select %p23, %s24, %s25
      %p29 = pneg %p23
      %p30 = scmp.eq.s32.totalorder %s14, 1
      %p31 = por %p29, %p30
      %p32 = scmp.ne.s32.totalorder %s24, %s27
      %p33 = scmp.eq.s32.totalorder %s14, 0
      %p34 = por %p32, %p33
      %p35 = scmp.ne.s32.totalorder %s24, %s27
      %p36 = scmp.eq.s32.totalorder %s19, 1
      %p37 = por %p35, %p36
      %p38 = scmp.ne.s32.totalorder %s27, %s28
      %p39 = scmp.eq.s32.totalorder %s19, 0
      %p40 = por %p38, %p39
      %p41 = scmp.ne.s32.totalorder %s27, %s28
      %p42 = scmp.eq.s32.totalorder %s20, 1
      %p43 = por %p41, %p42
      %p45 = scmp.ne.s32.totalorder %s28, %s44
      %p46 = scmp.eq.s32.totalorder %s20, 0
      %p47 = por %p45, %p46
      %s49 = sadd.s32 %s48, 1
      %p52 = scmp.eq.s32.totalorder %s14, 1
      %p53 = scmp.ne.s32.totalorder %s48, %s50
      %p54 = scmp.eq.s32.totalorder %s14, 0
      %p55 = por %p53, %p54
      %p56 = scmp.ne.s32.totalorder %s48, %s50
      %p57 = scmp.eq.s32.totalorder %s19, 1
      %p58 = por %p56, %p57
      %p59 = scmp.ne.s32.totalorder %s50, %s51
      %p60 = scmp.eq.s32.totalorder %s19, 0
      %p61 = por %p59, %p60
      %p62 = scmp.ne.s32.totalorder %s50, %s51
      %p63 = scmp.eq.s32.totalorder %s20, 1
      %p64 = por %p62, %p63
      %p66 = scmp.ne.s32.totalorder %s51, %s65
      %p67 = scmp.eq.s32.totalorder %s20, 0
      %p68 = por %p66, %p67
      %s70 = sadd.s32 %s69, 1
      %p73 = scmp.eq.s32.totalorder %s14, 1
      %p74 = scmp.ne.s32.totalorder %s69, %s71
      %p75 = scmp.eq.s32.totalorder %s14, 0
      %p76 = por %p74, %p75
      %p77 = scmp.ne.s32.totalorder %s69, %s71
      %p78 = scmp.eq.s32.totalorder %s19, 1
      %p79 = por %p77, %p78
      %p80 = scmp.ne.s32.totalorder %s71, %s72
      %p81 = scmp.eq.s32.totalorder %s19, 0
      %p82 = por %p80, %p81
      %p83 = scmp.ne.s32.totalorder %s71, %s72
      %p84 = scmp.eq.s32.totalorder %s20, 1
      %p85 = por %p83, %p84
      %p87 = scmp.ne.s32.totalorder %s72, %s86
      %p88 = scmp.eq.s32.totalorder %s20, 0
      %p89 = por %p87, %p88
      %s91 = sadd.s32 %s90, 1
      %p94 = scmp.eq.s32.totalorder %s14, 1
      %p95 = scmp.ne.s32.totalorder %s90, %s92
      %p96 = scmp.eq.s32.totalorder %s14, 0
      %p97 = por %p95, %p96
      %p98 = scmp.ne.s32.totalorder %s90, %s92
      %p99 = scmp.eq.s32.totalorder %s19, 1
      %p100 = por %p98, %p99
      %p101 = scmp.ne.s32.totalorder %s92, %s93
      %p102 = scmp.eq.s32.totalorder %s19, 0
      %p103 = por %p101, %p102
      %p104 = scmp.ne.s32.totalorder %s92, %s93
      %p105 = scmp.eq.s32.totalorder %s20, 1
      %p106 = por %p104, %p105
      %p108 = scmp.ne.s32.totalorder %s93, %s107
      %p109 = scmp.eq.s32.totalorder %s20, 0
      %p110 = por %p108, %p109
      %s112 = sadd.s32 %s111, 1
      %p115 = scmp.eq.s32.totalorder %s14, 1
      %p116 = scmp.ne.s32.totalorder %s111, %s113
      %p117 = scmp.eq.s32.totalorder %s14, 0
      %p118 = por %p116, %p117
      %p119 = scmp.ne.s32.totalorder %s111, %s113
      %p120 = scmp.eq.s32.totalorder %s19, 1
      %p121 = por %p119, %p120
      %p122 = scmp.ne.s32.totalorder %s113, %s114
      %p123 = scmp.eq.s32.totalorder %s19, 0
      %p124 = por %p122, %p123
      %p125 = scmp.ne.s32.totalorder %s113, %s114
      %p126 = scmp.eq.s32.totalorder %s20, 1
      %p127 = por %p125, %p126
      %p129 = scmp.ne.s32.totalorder %s114, %s128
      %p130 = scmp.eq.s32.totalorder %s20, 0
      %p131 = por %p129, %p130
      %s132 = ssub.s32 %s14, %s21
      %p133 = scmp.eq.s32.totalorder %s132, 0
      %s135 = sadd.s32 %s134, 1
      %s136 = scalar_select %p133, %s134, %s135
      %p139 = pneg %p133
      %p140 = scmp.eq.s32.totalorder %s14, 1
      %p141 = por %p139, %p140
      %p142 = scmp.ne.s32.totalorder %s134, %s137
      %p143 = scmp.eq.s32.totalorder %s14, 0
      %p144 = por %p142, %p143
      %p145 = scmp.ne.s32.totalorder %s134, %s137
      %p146 = scmp.eq.s32.totalorder %s19, 1
      %p147 = por %p145, %p146
      %p148 = scmp.ne.s32.totalorder %s137, %s138
      %p149 = scmp.eq.s32.totalorder %s19, 0
      %p150 = por %p148, %p149
      %p151 = scmp.ne.s32.totalorder %s137, %s138
      %p152 = scmp.eq.s32.totalorder %s20, 1
      %p153 = por %p151, %p152
      %p155 = scmp.ne.s32.totalorder %s138, %s154
      %p156 = scmp.eq.s32.totalorder %s20, 0
      %p157 = por %p155, %p156
      %p158 = scmp.le.s32.totalorder 1, %s14
      %p159 = scmp.lt.s32.totalorder %s14, 3
      %p160 = pnand %p158, %p159
      %p161 = pneg %p160
      // Predicated region
      $region9: #{joint_embedding_net.1} parent=5 // pred_check
        _
      $region10: #{joint_embedding_net.1} parent=5 // pred_check_branch
        %163 = sbr.rel (%p160) target = $region12
      $region11: #{joint_embedding_net.1} parent=5 // pred_region
        %s164 = ssub.s32 %s14, 1
        // Predicated region
        $region13: #{joint_embedding_net.1} parent=11 // pred_check
          %p165 = pneg %p61
        $region14: #{joint_embedding_net.1} parent=11 // pred_check_branch
          %167 = sbr.rel (%p165) target = $region16
        $region15: #{joint_embedding_net.1} parent=11 // pred_region
          _
        $region16: #{joint_embedding_net.1} parent=11 // pred_fallthru
          _
        // Predicated region
        $region17: #{joint_embedding_net.1} parent=11 // pred_check
          %p168 = pneg %p82
        $region18: #{joint_embedding_net.1} parent=11 // pred_check_branch
          %170 = sbr.rel (%p168) target = $region20
        $region19: #{joint_embedding_net.1} parent=11 // pred_region
          _
        $region20: #{joint_embedding_net.1} parent=11 // pred_fallthru
          _
        // Predicated region
        $region21: #{joint_embedding_net.1} parent=11 // pred_check
          %p171 = pneg %p103
        $region22: #{joint_embedding_net.1} parent=11 // pred_check_branch
          %173 = sbr.rel (%p171) target = $region24
        $region23: #{joint_embedding_net.1} parent=11 // pred_region
          _
        $region24: #{joint_embedding_net.1} parent=11 // pred_fallthru
          _
        // Predicated region
        $region25: #{joint_embedding_net.1} parent=11 // pred_check
          %p174 = pneg %p124
        $region26: #{joint_embedding_net.1} parent=11 // pred_check_branch
          %176 = sbr.rel (%p174) target = $region28
        $region27: #{joint_embedding_net.1} parent=11 // pred_region
          _
        $region28: #{joint_embedding_net.1} parent=11 // pred_fallthru
          _
      $region12: #{joint_embedding_net.1} parent=5 // pred_fallthru
        _
      %p177 = scmp.lt.s32.totalorder %s14, 2
      // Predicated region
      $region29: #{joint_embedding_net.1} parent=5 // pred_check
        %p178 = pneg %p177
      $region30: #{joint_embedding_net.1} parent=5 // pred_check_branch
        %180 = sbr.rel (%p178) target = $region32
      $region31: #{joint_embedding_net.1} parent=5 // pred_region
        // Predicated region
        $region33: #{joint_embedding_net.1} parent=31 // pred_check
          %p181 = pneg %p34
        $region34: #{joint_embedding_net.1} parent=31 // pred_check_branch
          %183 = sbr.rel (%p181) target = $region36
        $region35: #{joint_embedding_net.1} parent=31 // pred_region
          %p184 = scmp.lt.s32.totalorder %s14, 1
          %s185 = scalar_select %p184, %s14, 1
          %s186 = smul.addr %s185, 4
          %s187 = smul.addr %s186, 8
          %s188 = scalar_lea.vmem %s0, %s187
        $region36: #{joint_embedding_net.1} parent=31 // pred_fallthru
          _
      $region32: #{joint_embedding_net.1} parent=5 // pred_fallthru
        _
      %p189 = scmp.le.s32.totalorder 1, %s14
      %p190 = scmp.lt.s32.totalorder %s14, 3
      %p191 = pnand %p189, %p190
      %p192 = pneg %p191
      // Predicated region
      $region37: #{joint_embedding_net.1} parent=5 // pred_check
        _
      $region38: #{joint_embedding_net.1} parent=5 // pred_check_branch
        %194 = sbr.rel (%p191) target = $region40
      $region39: #{joint_embedding_net.1} parent=5 // pred_region
        %s195 = ssub.s32 %s14, 1
        %p196 = scmp.lt.s32.totalorder %s19, 1
        %s197 = scalar_select %p196, %s19, 1
        %s198 = smul.addr %s197, 4
        %s199 = smul.addr %s198, 8
        %s200 = scalar_lea.vmem %s0, %s199
        %p201 = pneg %p40
        %p202 = pneg %p37
        %p203 = pneg %p61
        %p204 = pneg %p58
        %p205 = pneg %p82
        %p206 = pneg %p79
        %p207 = pneg %p103
        %p208 = pneg %p100
        %p209 = pneg %p124
        %p210 = pneg %p121
        %p211 = pneg %p150
        %p212 = pneg %p147
        %s213 = sand.u32 %s137, 1
        %s214 = scalar_lea.sflag [#allocation3], %s213
        %s215 = sand.u32 %s137, 1
        %s216 = smul.addr %s215, 8
        %s217 = scalar_lea.vmem [#allocation2], %s216
        %p218 = scmp.lt.s32.totalorder %s19, 1
        %s219 = scalar_select %p218, %s19, 1
        %s220 = smul.addr %s219, 4
        %s221 = smul.addr %s220, 8
        %s222 = scalar_lea.vmem %s0, %s221
        %v223 = vld [vmem:[%s222] sm:$0xff]
        %v224 = vld [vmem:[%s222 + $0x8] sm:$0xff]
        %v225 = vld [vmem:[%s222 + $0x10] sm:$0xff]
        %v226 = vld [vmem:[%s222 + $0x18] sm:$0xff]
        %v227 = vld [vmem:[%s1] sm:$0xff]
        %v228 = vld [vmem:[%s1 + $0x8] sm:$0xff]
        %v229 = vld [vmem:[%s1 + $0x10] sm:$0xff]
        %v230 = vld [vmem:[%s1 + $0x18] sm:$0xff]
        %v231 = vld [vmem:[%s1 + $0x20] sm:$0xff]
        %v232 = vld [vmem:[%s1 + $0x28] sm:$0xff]
        %v233 = vld [vmem:[%s1 + $0x30] sm:$0xff]
        %v234 = vld [vmem:[%s1 + $0x38] sm:$0xff]
        %v235 = vld [vmem:[%s1 + $0x40] sm:$0xff]
        %v236 = vld [vmem:[%s1 + $0x48] sm:$0xff]
        %v237 = vld [vmem:[%s1 + $0x50] sm:$0xff]
        %v238 = vld [vmem:[%s1 + $0x58] sm:$0xff]
        %v239 = vld [vmem:[%s1 + $0x60] sm:$0xff]
        %v240 = vld [vmem:[%s1 + $0x68] sm:$0xff]
        %v241 = vld [vmem:[%s1 + $0x70] sm:$0xff]
        %v242 = vld [vmem:[%s1 + $0x78] sm:$0xff]
        %v243 = vld [vmem:[%s1 + $0x80] sm:$0xff]
        %v244 = vld [vmem:[%s1 + $0x88] sm:$0xff]
        %v245 = vld [vmem:[%s1 + $0x90] sm:$0xff]
        %v246 = vld [vmem:[%s1 + $0x98] sm:$0xff]
        %v247 = vld [vmem:[%s1 + $0xa0] sm:$0xff]
        %v248 = vld [vmem:[%s1 + $0xa8] sm:$0xff]
        %v249 = vld [vmem:[%s1 + $0xb0] sm:$0xff]
        %v250 = vld [vmem:[%s1 + $0xb8] sm:$0xff]
        %v251 = vld [vmem:[%s1 + $0xc0] sm:$0xff]
        %v252 = vld [vmem:[%s1 + $0xc8] sm:$0xff]
        %v253 = vld [vmem:[%s1 + $0xd0] sm:$0xff]
        %v254 = vld [vmem:[%s1 + $0xd8] sm:$0xff]
        %v255 = vld [vmem:[%s1 + $0xe0] sm:$0xff]
        %v256 = vld [vmem:[%s1 + $0xe8] sm:$0xff]
        %v257 = vld [vmem:[%s1 + $0xf0] sm:$0xff]
        %v258 = vld [vmem:[%s1 + $0xf8] sm:$0xff]
        %v259 = vld [vmem:[%s1 + $0x100] sm:$0xff]
        %v260 = vld [vmem:[%s1 + $0x108] sm:$0xff]
        %v261 = vld [vmem:[%s1 + $0x110] sm:$0xff]
        %v262 = vld [vmem:[%s1 + $0x118] sm:$0xff]
        %v263 = vld [vmem:[%s1 + $0x120] sm:$0xff]
        %v264 = vld [vmem:[%s1 + $0x128] sm:$0xff]
        %v265 = vld [vmem:[%s1 + $0x130] sm:$0xff]
        %v266 = vld [vmem:[%s1 + $0x138] sm:$0xff]
        %v267 = vld [vmem:[%s1 + $0x140] sm:$0xff]
        %v268 = vld [vmem:[%s1 + $0x148] sm:$0xff]
        %v269 = vld [vmem:[%s1 + $0x150] sm:$0xff]
        %v270 = vld [vmem:[%s1 + $0x158] sm:$0xff]
        %v271 = vld [vmem:[%s1 + $0x160] sm:$0xff]
        %v272 = vld [vmem:[%s1 + $0x168] sm:$0xff]
        %v273 = vld [vmem:[%s1 + $0x170] sm:$0xff]
        %v274 = vld [vmem:[%s1 + $0x178] sm:$0xff]
        %v275 = vld [vmem:[%s1 + $0x180] sm:$0xff]
        %v276 = vld [vmem:[%s1 + $0x188] sm:$0xff]
        %v277 = vld [vmem:[%s1 + $0x190] sm:$0xff]
        %v278 = vld [vmem:[%s1 + $0x198] sm:$0xff]
        %v279 = vld [vmem:[%s1 + $0x1a0] sm:$0xff]
        %v280 = vld [vmem:[%s1 + $0x1a8] sm:$0xff]
        %v281 = vld [vmem:[%s1 + $0x1b0] sm:$0xff]
        %v282 = vld [vmem:[%s1 + $0x1b8] sm:$0xff]
        %v283 = vld [vmem:[%s1 + $0x1c0] sm:$0xff]
        %v284 = vld [vmem:[%s1 + $0x1c8] sm:$0xff]
        %v285 = vld [vmem:[%s1 + $0x1d0] sm:$0xff]
        %v286 = vld [vmem:[%s1 + $0x1d8] sm:$0xff]
        %v287 = vld [vmem:[%s1 + $0x1e0] sm:$0xff]
        %v288 = vld [vmem:[%s1 + $0x1e8] sm:$0xff]
        %v289 = vld [vmem:[%s1 + $0x1f0] sm:$0xff]
        %v290 = vld [vmem:[%s1 + $0x1f8] sm:$0xff]
        %v291 = vld [vmem:[%s1 + $0x200] sm:$0xff]
        %v292 = vld [vmem:[%s1 + $0x208] sm:$0xff]
        %v293 = vld [vmem:[%s1 + $0x210] sm:$0xff]
        %v294 = vld [vmem:[%s1 + $0x218] sm:$0xff]
        %v295 = vld [vmem:[%s1 + $0x220] sm:$0xff]
        %v296 = vld [vmem:[%s1 + $0x228] sm:$0xff]
        %v297 = vld [vmem:[%s1 + $0x230] sm:$0xff]
        %v298 = vld [vmem:[%s1 + $0x238] sm:$0xff]
        %v299 = vld [vmem:[%s1 + $0x240] sm:$0xff]
        %v300 = vld [vmem:[%s1 + $0x248] sm:$0xff]
        %v301 = vld [vmem:[%s1 + $0x250] sm:$0xff]
        %v302 = vld [vmem:[%s1 + $0x258] sm:$0xff]
        %v303 = vld [vmem:[%s1 + $0x260] sm:$0xff]
        %v304 = vld [vmem:[%s1 + $0x268] sm:$0xff]
        %v305 = vld [vmem:[%s1 + $0x270] sm:$0xff]
        %v306 = vld [vmem:[%s1 + $0x278] sm:$0xff]
        %v307 = vld [vmem:[%s1 + $0x280] sm:$0xff]
        %v308 = vld [vmem:[%s1 + $0x288] sm:$0xff]
        %v309 = vld [vmem:[%s1 + $0x290] sm:$0xff]
        %v310 = vld [vmem:[%s1 + $0x298] sm:$0xff]
        %v311 = vld [vmem:[%s1 + $0x2a0] sm:$0xff]
        %v312 = vld [vmem:[%s1 + $0x2a8] sm:$0xff]
        %v313 = vld [vmem:[%s1 + $0x2b0] sm:$0xff]
        %v314 = vld [vmem:[%s1 + $0x2b8] sm:$0xff]
        %v315 = vld [vmem:[%s1 + $0x2c0] sm:$0xff]
        %v316 = vld [vmem:[%s1 + $0x2c8] sm:$0xff]
        %v317 = vld [vmem:[%s1 + $0x2d0] sm:$0xff]
        %v318 = vld [vmem:[%s1 + $0x2d8] sm:$0xff]
        %v319 = vld [vmem:[%s1 + $0x2e0] sm:$0xff]
        %v320 = vld [vmem:[%s1 + $0x2e8] sm:$0xff]
        %v321 = vld [vmem:[%s1 + $0x2f0] sm:$0xff]
        %v322 = vld [vmem:[%s1 + $0x2f8] sm:$0xff]
        %v323 = vld [vmem:[%s1 + $0x300] sm:$0xff]
        %v324 = vld [vmem:[%s1 + $0x308] sm:$0xff]
        %v325 = vld [vmem:[%s1 + $0x310] sm:$0xff]
        %v326 = vld [vmem:[%s1 + $0x318] sm:$0xff]
        %v327 = vld [vmem:[%s1 + $0x320] sm:$0xff]
        %v328 = vld [vmem:[%s1 + $0x328] sm:$0xff]
        %v329 = vld [vmem:[%s1 + $0x330] sm:$0xff]
        %v330 = vld [vmem:[%s1 + $0x338] sm:$0xff]
        %v331 = vld [vmem:[%s1 + $0x340] sm:$0xff]
        %v332 = vld [vmem:[%s1 + $0x348] sm:$0xff]
        %v333 = vld [vmem:[%s1 + $0x350] sm:$0xff]
        %v334 = vld [vmem:[%s1 + $0x358] sm:$0xff]
        %v335 = vld [vmem:[%s1 + $0x360] sm:$0xff]
        %v336 = vld [vmem:[%s1 + $0x368] sm:$0xff]
        %v337 = vld [vmem:[%s1 + $0x370] sm:$0xff]
        %v338 = vld [vmem:[%s1 + $0x378] sm:$0xff]
        %v339 = vld [vmem:[%s1 + $0x380] sm:$0xff]
        %v340 = vld [vmem:[%s1 + $0x388] sm:$0xff]
        %v341 = vld [vmem:[%s1 + $0x390] sm:$0xff]
        %v342 = vld [vmem:[%s1 + $0x398] sm:$0xff]
        %v343 = vld [vmem:[%s1 + $0x3a0] sm:$0xff]
        %v344 = vld [vmem:[%s1 + $0x3a8] sm:$0xff]
        %v345 = vld [vmem:[%s1 + $0x3b0] sm:$0xff]
        %v346 = vld [vmem:[%s1 + $0x3b8] sm:$0xff]
        %v347 = vld [vmem:[%s1 + $0x3c0] sm:$0xff]
        %v348 = vld [vmem:[%s1 + $0x3c8] sm:$0xff]
        %v349 = vld [vmem:[%s1 + $0x3d0] sm:$0xff]
        %v350 = vld [vmem:[%s1 + $0x3d8] sm:$0xff]
        %v351 = vld [vmem:[%s1 + $0x3e0] sm:$0xff]
        %v352 = vld [vmem:[%s1 + $0x3e8] sm:$0xff]
        %v353 = vld [vmem:[%s1 + $0x3f0] sm:$0xff]
        %v354 = vld [vmem:[%s1 + $0x3f8] sm:$0xff]
        %v355 = vld [vmem:[%s2] sm:$0x3]
        %v357 = vlaneseq
        %v358 = vshrl.u32 %v357, 7
        %v359 = vsub.s32 0, %v358
        %v360 = vrot.slane %v355, %v359
        %v361 = vlaneseq
        %v362 = vshrl.u32 %v361, 7
        %v363 = vsub.s32 1, %v362
        %v364 = vrot.slane %v355, %v363
        %367 = vmatprep.subr.mxu0 %v228
        %368 = vmatpush1.msra.mxu0 %v227
        %369 = vmatprep.subr.mxu0 %v230
        %370 = vmatpush1.msra.mxu0 %v229
        %371 = vmatprep.subr.mxu0 %v232
        %372 = vmatpush1.msra.mxu0 %v231
        %373 = vmatprep.subr.mxu0 %v234
        %374 = vmatpush1.msra.mxu0 %v233
        %375 = vmatprep.subr.mxu0 %v236
        %376 = vmatpush1.msra.mxu0 %v235
        %377 = vmatprep.subr.mxu0 %v238
        %378 = vmatpush1.msra.mxu0 %v237
        %379 = vmatprep.subr.mxu0 %v240
        %380 = vmatpush1.msra.mxu0 %v239
        %381 = vmatprep.subr.mxu0 %v242
        %382 = vmatpush1.msra.mxu0 %v241
        %383 = vmatprep.subr.mxu0 %v244
        %384 = vmatpush1.msra.mxu0 %v243
        %385 = vmatprep.subr.mxu0 %v246
        %386 = vmatpush1.msra.mxu0 %v245
        %387 = vmatprep.subr.mxu0 %v248
        %388 = vmatpush1.msra.mxu0 %v247
        %389 = vmatprep.subr.mxu0 %v250
        %390 = vmatpush1.msra.mxu0 %v249
        %391 = vmatprep.subr.mxu0 %v252
        %392 = vmatpush1.msra.mxu0 %v251
        %393 = vmatprep.subr.mxu0 %v254
        %394 = vmatpush1.msra.mxu0 %v253
        %395 = vmatprep.subr.mxu0 %v256
        %396 = vmatpush1.msra.mxu0 %v255
        %397 = vmatprep.subr.mxu0 %v258
        %398 = vmatpush1.msra.mxu0 %v257
        %399 = vmatprep.subr.mxu0 %v260
        %400 = vmatpush1.msra.mxu0 %v259
        %401 = vmatprep.subr.mxu0 %v262
        %402 = vmatpush1.msra.mxu0 %v261
        %403 = vmatprep.subr.mxu0 %v264
        %404 = vmatpush1.msra.mxu0 %v263
        %405 = vmatprep.subr.mxu0 %v266
        %406 = vmatpush1.msra.mxu0 %v265
        %407 = vmatprep.subr.mxu0 %v268
        %408 = vmatpush1.msra.mxu0 %v267
        %409 = vmatprep.subr.mxu0 %v270
        %410 = vmatpush1.msra.mxu0 %v269
        %411 = vmatprep.subr.mxu0 %v272
        %412 = vmatpush1.msra.mxu0 %v271
        %413 = vmatprep.subr.mxu0 %v274
        %414 = vmatpush1.msra.mxu0 %v273
        %415 = vmatprep.subr.mxu0 %v276
        %416 = vmatpush1.msra.mxu0 %v275
        %417 = vmatprep.subr.mxu0 %v278
        %418 = vmatpush1.msra.mxu0 %v277
        %419 = vmatprep.subr.mxu0 %v280
        %420 = vmatpush1.msra.mxu0 %v279
        %421 = vmatprep.subr.mxu0 %v282
        %422 = vmatpush1.msra.mxu0 %v281
        %423 = vmatprep.subr.mxu0 %v284
        %424 = vmatpush1.msra.mxu0 %v283
        %425 = vmatprep.subr.mxu0 %v286
        %426 = vmatpush1.msra.mxu0 %v285
        %427 = vmatprep.subr.mxu0 %v288
        %428 = vmatpush1.msra.mxu0 %v287
        %429 = vmatprep.subr.mxu0 %v290
        %430 = vmatpush1.msra.mxu0 %v289
        %431 = vmatprep.mubr.f32.mxu0 %v224
        %432 = vmatmul.mubr.f32.gmra.mrb[0].mxu0 %v223
        %v433 = vpop.f32.mrb[0].mxu0
        %v434 = vadd.f32 %v360, %v433
        %v435 = vpop.f32.mrb[0].mxu0
        %v436 = vadd.f32 %v364, %v435
        %437 = vdwg.mxu0
        %438 = vmatprep.subr.mxu0 %v292
        %439 = vmatpush1.msra.mxu0 %v291
        %440 = vmatprep.subr.mxu0 %v294
        %441 = vmatpush1.msra.mxu0 %v293
        %442 = vmatprep.subr.mxu0 %v296
        %443 = vmatpush1.msra.mxu0 %v295
        %444 = vmatprep.subr.mxu0 %v298
        %445 = vmatpush1.msra.mxu0 %v297
        %446 = vmatprep.subr.mxu0 %v300
        %447 = vmatpush1.msra.mxu0 %v299
        %448 = vmatprep.subr.mxu0 %v302
        %449 = vmatpush1.msra.mxu0 %v301
        %450 = vmatprep.subr.mxu0 %v304
        %451 = vmatpush1.msra.mxu0 %v303
        %452 = vmatprep.subr.mxu0 %v306
        %453 = vmatpush1.msra.mxu0 %v305
        %454 = vmatprep.subr.mxu0 %v308
        %455 = vmatpush1.msra.mxu0 %v307
        %456 = vmatprep.subr.mxu0 %v310
        %457 = vmatpush1.msra.mxu0 %v309
        %458 = vmatprep.subr.mxu0 %v312
        %459 = vmatpush1.msra.mxu0 %v311
        %460 = vmatprep.subr.mxu0 %v314
        %461 = vmatpush1.msra.mxu0 %v313
        %462 = vmatprep.subr.mxu0 %v316
        %463 = vmatpush1.msra.mxu0 %v315
        %464 = vmatprep.subr.mxu0 %v318
        %465 = vmatpush1.msra.mxu0 %v317
        %466 = vmatprep.subr.mxu0 %v320
        %467 = vmatpush1.msra.mxu0 %v319
        %468 = vmatprep.subr.mxu0 %v322
        %469 = vmatpush1.msra.mxu0 %v321
        %470 = vmatprep.subr.mxu0 %v324
        %471 = vmatpush1.msra.mxu0 %v323
        %472 = vmatprep.subr.mxu0 %v326
        %473 = vmatpush1.msra.mxu0 %v325
        %474 = vmatprep.subr.mxu0 %v328
        %475 = vmatpush1.msra.mxu0 %v327
        %476 = vmatprep.subr.mxu0 %v330
        %477 = vmatpush1.msra.mxu0 %v329
        %478 = vmatprep.subr.mxu0 %v332
        %479 = vmatpush1.msra.mxu0 %v331
        %480 = vmatprep.subr.mxu0 %v334
        %481 = vmatpush1.msra.mxu0 %v333
        %482 = vmatprep.subr.mxu0 %v336
        %483 = vmatpush1.msra.mxu0 %v335
        %484 = vmatprep.subr.mxu0 %v338
        %485 = vmatpush1.msra.mxu0 %v337
        %486 = vmatprep.subr.mxu0 %v340
        %487 = vmatpush1.msra.mxu0 %v339
        %488 = vmatprep.subr.mxu0 %v342
        %489 = vmatpush1.msra.mxu0 %v341
        %490 = vmatprep.subr.mxu0 %v344
        %491 = vmatpush1.msra.mxu0 %v343
        %492 = vmatprep.subr.mxu0 %v346
        %493 = vmatpush1.msra.mxu0 %v345
        %494 = vmatprep.subr.mxu0 %v348
        %495 = vmatpush1.msra.mxu0 %v347
        %496 = vmatprep.subr.mxu0 %v350
        %497 = vmatpush1.msra.mxu0 %v349
        %498 = vmatprep.subr.mxu0 %v352
        %499 = vmatpush1.msra.mxu0 %v351
        %500 = vmatprep.subr.mxu0 %v354
        %501 = vmatpush1.msra.mxu0 %v353
        %502 = vmatprep.mubr.f32.mxu0 %v226
        %503 = vmatmul.mubr.f32.gmra.mrb[0].mxu0 %v225
        %v504 = vpop.f32.mrb[0].mxu0
        %v505 = vadd.f32 %v434, %v504
        %v506 = vpop.f32.mrb[0].mxu0
        %v507 = vadd.f32 %v436, %v506
        %508 = vdwg.mxu0
        %v509 = vmax.f32 %v505, 0.0
        %v510 = vmax.f32 %v507, 0.0
        %v511 = vld [vmem:[%s3] sm:$0xff]
        %v512 = vld [vmem:[%s3 + $0x8] sm:$0xff]
        %v513 = vld [vmem:[%s3 + $0x10] sm:$0xff]
        %v514 = vld [vmem:[%s3 + $0x18] sm:$0xff]
        %v515 = vld [vmem:[%s3 + $0x20] sm:$0xff]
        %v516 = vld [vmem:[%s3 + $0x28] sm:$0xff]
        %v517 = vld [vmem:[%s3 + $0x30] sm:$0xff]
        %v518 = vld [vmem:[%s3 + $0x38] sm:$0xff]
        %v519 = vld [vmem:[%s3 + $0x40] sm:$0xff]
        %v520 = vld [vmem:[%s3 + $0x48] sm:$0xff]
        %v521 = vld [vmem:[%s3 + $0x50] sm:$0xff]
        %v522 = vld [vmem:[%s3 + $0x58] sm:$0xff]
        %v523 = vld [vmem:[%s3 + $0x60] sm:$0xff]
        %v524 = vld [vmem:[%s3 + $0x68] sm:$0xff]
        %v525 = vld [vmem:[%s3 + $0x70] sm:$0xff]
        %v526 = vld [vmem:[%s3 + $0x78] sm:$0xff]
        %v527 = vld [vmem:[%s3 + $0x80] sm:$0xff]
        %v528 = vld [vmem:[%s3 + $0x88] sm:$0xff]
        %v529 = vld [vmem:[%s3 + $0x90] sm:$0xff]
        %v530 = vld [vmem:[%s3 + $0x98] sm:$0xff]
        %v531 = vld [vmem:[%s3 + $0xa0] sm:$0xff]
        %v532 = vld [vmem:[%s3 + $0xa8] sm:$0xff]
        %v533 = vld [vmem:[%s3 + $0xb0] sm:$0xff]
        %v534 = vld [vmem:[%s3 + $0xb8] sm:$0xff]
        %v535 = vld [vmem:[%s3 + $0xc0] sm:$0xff]
        %v536 = vld [vmem:[%s3 + $0xc8] sm:$0xff]
        %v537 = vld [vmem:[%s3 + $0xd0] sm:$0xff]
        %v538 = vld [vmem:[%s3 + $0xd8] sm:$0xff]
        %v539 = vld [vmem:[%s3 + $0xe0] sm:$0xff]
        %v540 = vld [vmem:[%s3 + $0xe8] sm:$0xff]
        %v541 = vld [vmem:[%s3 + $0xf0] sm:$0xff]
        %v542 = vld [vmem:[%s3 + $0xf8] sm:$0xff]
        %v543 = vld [vmem:[%s4] sm:$0x1]
        %v545 = vlaneseq
        %v546 = vshrl.u32 %v545, 7
        %v547 = vsub.s32 0, %v546
        %v548 = vrot.slane %v543, %v547
        %550 = vmatprep.subr.mxu0 0.0
        %551 = vmatpush1.msra.mxu0 %v511
        %552 = vmatprep.subr.mxu0 0.0
        %553 = vmatpush1.msra.mxu0 %v512
        %554 = vmatprep.subr.mxu0 0.0
        %555 = vmatpush1.msra.mxu0 %v513
        %556 = vmatprep.subr.mxu0 0.0
        %557 = vmatpush1.msra.mxu0 %v514
        %558 = vmatprep.subr.mxu0 0.0
        %559 = vmatpush1.msra.mxu0 %v515
        %560 = vmatprep.subr.mxu0 0.0
        %561 = vmatpush1.msra.mxu0 %v516
        %562 = vmatprep.subr.mxu0 0.0
        %563 = vmatpush1.msra.mxu0 %v517
        %564 = vmatprep.subr.mxu0 0.0
        %565 = vmatpush1.msra.mxu0 %v518
        %566 = vmatprep.subr.mxu0 0.0
        %567 = vmatpush1.msra.mxu0 %v519
        %568 = vmatprep.subr.mxu0 0.0
        %569 = vmatpush1.msra.mxu0 %v520
        %570 = vmatprep.subr.mxu0 0.0
        %571 = vmatpush1.msra.mxu0 %v521
        %572 = vmatprep.subr.mxu0 0.0
        %573 = vmatpush1.msra.mxu0 %v522
        %574 = vmatprep.subr.mxu0 0.0
        %575 = vmatpush1.msra.mxu0 %v523
        %576 = vmatprep.subr.mxu0 0.0
        %577 = vmatpush1.msra.mxu0 %v524
        %578 = vmatprep.subr.mxu0 0.0
        %579 = vmatpush1.msra.mxu0 %v525
        %580 = vmatprep.subr.mxu0 0.0
        %581 = vmatpush1.msra.mxu0 %v526
        %582 = vmatprep.subr.mxu0 0.0
        %583 = vmatpush1.msra.mxu0 %v527
        %584 = vmatprep.subr.mxu0 0.0
        %585 = vmatpush1.msra.mxu0 %v528
        %586 = vmatprep.subr.mxu0 0.0
        %587 = vmatpush1.msra.mxu0 %v529
        %588 = vmatprep.subr.mxu0 0.0
        %589 = vmatpush1.msra.mxu0 %v530
        %590 = vmatprep.subr.mxu0 0.0
        %591 = vmatpush1.msra.mxu0 %v531
        %592 = vmatprep.subr.mxu0 0.0
        %593 = vmatpush1.msra.mxu0 %v532
        %594 = vmatprep.subr.mxu0 0.0
        %595 = vmatpush1.msra.mxu0 %v533
        %596 = vmatprep.subr.mxu0 0.0
        %597 = vmatpush1.msra.mxu0 %v534
        %598 = vmatprep.subr.mxu0 0.0
        %599 = vmatpush1.msra.mxu0 %v535
        %600 = vmatprep.subr.mxu0 0.0
        %601 = vmatpush1.msra.mxu0 %v536
        %602 = vmatprep.subr.mxu0 0.0
        %603 = vmatpush1.msra.mxu0 %v537
        %604 = vmatprep.subr.mxu0 0.0
        %605 = vmatpush1.msra.mxu0 %v538
        %606 = vmatprep.subr.mxu0 0.0
        %607 = vmatpush1.msra.mxu0 %v539
        %608 = vmatprep.subr.mxu0 0.0
        %609 = vmatpush1.msra.mxu0 %v540
        %610 = vmatprep.subr.mxu0 0.0
        %611 = vmatpush1.msra.mxu0 %v541
        %612 = vmatprep.subr.mxu0 0.0
        %613 = vmatpush1.msra.mxu0 %v542
        %614 = vmatprep.mubr.f32.mxu0 %v510
        %615 = vmatmul.mubr.f32.gmra.mrb[0].mxu0 %v509
        %v616 = vpop.f32.mrb[0].mxu0
        %v617 = vadd.f32 %v548, %v616
        %v618 = vpop.f32.mrb[0].mxu0
        %619 = vdwg.mxu0
        %620 = vst [vmem:[%s217] sm:$0xff] %v617
        %s621 = sand.u32 %s137, 1
        %s622 = scalar_lea.sflag [#allocation3], %s621
        %s623 = sand.u32 %s137, 1
        %s624 = smul.addr %s623, 8
        %s625 = scalar_lea.vmem [#allocation2], %s624
        // Predicated region
        $region41: #{joint_embedding_net.1} parent=39 // pred_check
          %p626 = pneg %p147
        $region42: #{joint_embedding_net.1} parent=39 // pred_check_branch
          %628 = sbr.rel (%p626) target = $region44
        $region43: #{joint_embedding_net.1} parent=39 // pred_region
          %s630 = ssub.s32 128, 128
          %631 = vsyncadd %s622, %s630
          %s632 = smul.addr %s19, 128
          %s633 = scalar_lea.hbm %s5, %s632
          %s635 = sshll.u32 %s625, 4
          %s636 = int_to_ptr.vmem [resolvable:$true] %s635
          %638 = dma.vmem_to_hbm [thread:$0]  %s636, 128, %s633, %s622
        $region44: #{joint_embedding_net.1} parent=39 // pred_fallthru
          _
      $region40: #{joint_embedding_net.1} parent=5 // pred_fallthru
        _
      %p639 = scmp.le.s32.totalorder 2, %s14
      // Predicated region
      $region45: #{joint_embedding_net.1} parent=5 // pred_check
        %p640 = pneg %p639
      $region46: #{joint_embedding_net.1} parent=5 // pred_check_branch
        %642 = sbr.rel (%p640) target = $region48
      $region47: #{joint_embedding_net.1} parent=5 // pred_region
        %s643 = ssub.s32 %s14, 2
        // Predicated region
        $region49: #{joint_embedding_net.1} parent=47 // pred_check
          %p644 = pneg %p153
        $region50: #{joint_embedding_net.1} parent=47 // pred_check_branch
          %646 = sbr.rel (%p644) target = $region52
        $region51: #{joint_embedding_net.1} parent=47 // pred_region
          %s647 = sand.u32 %s138, 1
          %s648 = scalar_lea.sflag [#allocation3], %s647
          %s649 = sand.u32 %s138, 1
          %s650 = smul.addr %s649, 8
          %s651 = scalar_lea.vmem [#allocation2], %s650
          %652 = dma.done %s648, 128
        $region52: #{joint_embedding_net.1} parent=47 // pred_fallthru
          _
      $region48: #{joint_embedding_net.1} parent=5 // pred_fallthru
        _
    $region6: #{joint_embedding_net.1} parent=1 // loop_footer
      %s18 = sadd.s32 1, %s14
    $region7: #{joint_embedding_net.1} parent=1 // loop_footer_branch
      %13 = sbr.rel target = $region3
    $region8: #{joint_embedding_net.1} parent=1 // loop_exit
      _
    %653 = vsyncpa [#allocation3], 1
    %s654 = scalar_lea.sflag [#allocation3], 1
    %655 = vsyncpa %s654, 1

</llo_original>
